<compile_context>
chip_gen: v7x
topology: tpu7x:2x2x1
jax: 0.10.0
libtpu: 0.0.40
codegen_flags: <defaults>
</compile_context>

<pallas_src>
import jax
import jax.numpy as jnp
from jax.experimental import pallas as pl
from jax.experimental.pallas import tpu as pltpu


# ---------------------------------------------------------------------------
# Pallas kernel: one (batch, vertex-tile) block of   ndc = v @ M
#   m_ref : (B*16,) fused per-batch 4x4 matrices, row-major flattened, in SMEM
#   v_ref : (1, 4, Vt) homogeneous points, coordinate-major (V on lanes), VMEM
#   o_ref : (1, 4, Vt) NDC output, coordinate-major, VMEM
# The 4x4 contraction is unrolled into 4 rows of V-wide scalar-times-vector
# FMAs on the VPU (scalar coefficients come straight from SMEM).
# ---------------------------------------------------------------------------
def _opengl_kernel(m_ref, v_ref, o_ref):
    base = pl.program_id(0) * 16          # start of this batch's fused matrix
    v = v_ref[0]                           # (4, Vt) float32
    x = v[0:1, :]                          # (1, Vt)  -- lane-dense coord rows
    y = v[1:2, :]
    z = v[2:3, :]
    w = v[3:4, :]
    for j in range(4):                     # unrolled: out[:, j] = sum_i v_i * M[i, j]
        o_ref[0, j:j + 1, :] = (x * m_ref[base + 0 + j]
                                + y * m_ref[base + 4 + j]
                                + z * m_ref[base + 8 + j]
                                + w * m_ref[base + 12 + j])


def _project_pallas(v_cm, m_flat, vt):
    """v_cm: (B, 4, Vp) coordinate-major homogeneous points (Vp % vt == 0),
    m_flat: (B*16,) fused matrices. Returns (B, 4, Vp) NDC (coordinate-major)."""
    B, _, Vp = v_cm.shape
    grid = (B, Vp // vt)
    return pl.pallas_call(
        _opengl_kernel,
        out_shape=jax.ShapeDtypeStruct((B, 4, Vp), jnp.float32),
        grid=grid,
        in_specs=[
            # All fused 4x4s live in SMEM for the whole grid (scalar reads).
            pl.BlockSpec(memory_space=pltpu.MemorySpace.SMEM),
            # Lane-dense vertex tiles: last dim (Vt) is a multiple of 128.
            pl.BlockSpec((1, 4, vt), lambda b, v: (b, 0, v)),
        ],
        out_specs=pl.BlockSpec((1, 4, vt), lambda b, v: (b, 0, v)),
        compiler_params=pltpu.CompilerParams(
            dimension_semantics=("parallel", "parallel")),
    )(m_flat, v_cm)


# ---------------------------------------------------------------------------
# Plain-JAX glue: projection matrix, closed-form extrinsics inverse, fusion.
# ---------------------------------------------------------------------------
def _build_proj(fx, fy, px, py, w, h):
    sx = 0.0
    x0, y0 = 0.0, 0.0
    n_, f_ = 0.1, 50.0
    return jnp.array(
        [[2.0 * fx / w, 0.0, 0.0, 0.0],
         [-2.0 * sx / w, -2.0 * fy / h, 0.0, 0.0],
         [(w - 2.0 * px + 2.0 * x0) / w, (h - 2.0 * py + 2.0 * y0) / h,
          -(f_ + n_) / (f_ - n_), -1.0],
         [0.0, 0.0, -(2.0 * f_ * n_) / (f_ - n_), 0.0]],
        dtype=jnp.float32)[None]  # (1, 4, 4)


def _inv3x3(R):
    """Batched closed-form (adjugate) 3x3 inverse. R: (b, 3, 3)."""
    a, b, c = R[:, 0, 0], R[:, 0, 1], R[:, 0, 2]
    d, e, f = R[:, 1, 0], R[:, 1, 1], R[:, 1, 2]
    g, h, i = R[:, 2, 0], R[:, 2, 1], R[:, 2, 2]
    A = e * i - f * h
    B = f * g - d * i
    C = d * h - e * g
    det = a * A + b * B + c * C
    adj = jnp.stack([
        jnp.stack([A, c * h - b * i, b * f - c * e], axis=-1),
        jnp.stack([B, a * i - c * g, c * d - a * f], axis=-1),
        jnp.stack([C, b * g - a * h, a * e - b * d], axis=-1),
    ], axis=-2)
    return adj / det[:, None, None]


def _round_up(x, m):
    return ((x + m - 1) // m) * m


class OpenGLPallas:
    """JAX/Pallas port of kbody_adithya OpenGL (default + `image` paths)."""

    def __init__(self, focal_length=5000.0, principal_point=0.5,
                 width=None, height=None, rotation=None, translation=None,
                 vertex_tile=1024, min_pallas_verts=1024):
        self.focal_length = ((focal_length, focal_length)
                             if isinstance(focal_length, float) else focal_length)
        self.principal_point = ((principal_point, principal_point)
                                if isinstance(principal_point, float)
                                else principal_point)
        self.resolution = (width, height)
        if principal_point is None:
            self.principal_point = (float(width // 2), float(height // 2))
            self.has_nominal_principal = True
        else:
            self.has_nominal_principal = False

        fx, fy = self.focal_length
        px, py = self.principal_point
        self.mat = _build_proj(fx, fy, px, py, width, height)  # buffer (1,4,4)

        # Deterministic parameter init (matches module defaults).
        self.rotation = (jnp.eye(3, dtype=jnp.float32)[None]
                         if rotation is None else rotation)           # (1,3,3)
        self.translation = (jnp.zeros((1, 3), dtype=jnp.float32)
                            if translation is None else translation)  # (1,3)

        self.vertex_tile = int(vertex_tile)          # multiple of 128
        self.min_pallas_verts = int(min_pallas_verts)

    def _fused_matrix(self, b, proj, rotation, translation):
        """M = inv(Rt) @ proj per batch, with inv(Rt) in closed form.
        Rt = [[R, 0], [t_row, 1]] (row-vector convention, as in the module),
        so inv(Rt) = [[R^-1, 0], [-t_row @ R^-1, 1]] exactly."""
        t = (translation if translation is not None
             else jnp.broadcast_to(self.translation, (b, 3))).astype(jnp.float32)
        R = (rotation if rotation is not None
             else jnp.broadcast_to(self.rotation, (b, 3, 3))).astype(jnp.float32)

        # NOTE: sign convention (-t_x, +t_y, +t_z) replicates the original module.
        t_row = jnp.stack([-t[:, 0], t[:, 1], t[:, 2]], axis=-1)      # (b, 3)
        R_inv = _inv3x3(R)                                            # (b, 3, 3)
        bottom = -jnp.einsum('bi,bij->bj', t_row, R_inv)              # (b, 3)

        inv_Rt = jnp.zeros((b, 4, 4), dtype=jnp.float32)
        inv_Rt = inv_Rt.at[:, :3, :3].set(R_inv)
        inv_Rt = inv_Rt.at[:, 3, :3].set(bottom)
        inv_Rt = inv_Rt.at[:, 3, 3].set(1.0)

        proj_b = jnp.broadcast_to(proj, (b, 4, 4)).astype(jnp.float32)
        return jnp.einsum('bij,bjk->bik', inv_Rt, proj_b)             # (b, 4, 4)

    def __call__(self, points, image=None, rotation=None, translation=None):
        # TODO(synk): nominal_image / aspect_image / intrinsics branches only
        # change how the 4x4 `proj` is built (host-side scalar glue); not ported.
        fx, fy = self.focal_length
        if image is not None:
            w, h = image.shape[-1], image.shape[-2]
            px, py = w / 2.0, h / 2.0
            proj = _build_proj(fx, fy, px, py, w, h)
        else:
            proj = self.mat

        b = points.shape[0]
        M = self._fused_matrix(b, proj, rotation, translation)        # (b,4,4)

        pts = points.astype(jnp.float32)   # explicit cast policy: f32 everywhere
        if pts.shape[-1] == 3:
            v_h = jnp.concatenate(
                [pts, jnp.ones(pts.shape[:-1] + (1,), jnp.float32)], axis=-1)
        else:
            v_h = pts                                                  # (b, V, 4)
        V = v_h.shape[1]

        # Tiny workloads: a Pallas grid step is mostly launch overhead; plain
        # XLA einsum is faster and bit-equivalent up to reassociation.
        if b * V < self.min_pallas_verts:
            return jnp.einsum('bvi,bij->bvj', v_h, M)

        # Coordinate-major, lane-dense layout for the kernel: (b, 4, Vp).
        v_cm = jnp.swapaxes(v_h, 1, 2)                                 # (b, 4, V)
        vt = self.vertex_tile
        Vp = _round_up(V, 128)
        if Vp <= vt:
            vt = Vp
        else:
            Vp = _round_up(Vp, vt)
        if Vp != V:
            v_cm = jnp.pad(v_cm, ((0, 0), (0, 0), (0, Vp - V)))

        m_flat = M.reshape(b * 16)                                     # SMEM payload
        ndc_cm = _project_pallas(v_cm, m_flat, vt)                     # (b, 4, Vp)
        return jnp.swapaxes(ndc_cm[:, :, :V], 1, 2)                    # (b, V, 4)


# ---------------------------------------------------------------------------
# Pure-JAX reference implementing the ORIGINAL module math (4x4 LU inverse,
# two chained einsums) — used to validate both the closed-form inverse and the
# Pallas kernel.
# ---------------------------------------------------------------------------
def _reference(points, R, t, proj):
    b = points.shape[0]
    Rt = jnp.zeros((b, 4, 4), dtype=jnp.float32)
    Rt = Rt.at[:, :3, :3].set(R)
    Rt = Rt.at[:, 3, 0].set(-t[:, 0])
    Rt = Rt.at[:, 3, 1].set(t[:, 1])
    Rt = Rt.at[:, 3, 2].set(t[:, 2])
    Rt = Rt.at[:, 3, 3].set(1.0)
    inv_Rt = jnp.linalg.inv(Rt)
    v = jnp.pad(points, ((0, 0), (0, 0), (0, 1)), constant_values=1.0)
    xf = jnp.einsum('bvi,bij->bvj', v, inv_Rt)
    return jnp.einsum('bvi,bij->bvj', xf, jnp.broadcast_to(proj, (b, 4, 4)))


if __name__ == "__main__":
    key = jax.random.PRNGKey(0)
    k1, k2 = jax.random.split(key)

    # Non-trivial deterministic extrinsics so the kernel is exercised beyond
    # identity.
    theta = 0.3
    Rz = jnp.array([[jnp.cos(theta), -jnp.sin(theta), 0.0],
                    [jnp.sin(theta), jnp.cos(theta), 0.0],
                    [0.0, 0.0, 1.0]], dtype=jnp.float32)[None]
    trans = jnp.array([[0.1, -0.2, 2.5]], dtype=jnp.float32)

    module = OpenGLPallas(focal_length=5000.0, principal_point=0.5,
                          width=16, height=16, rotation=Rz, translation=trans)

    # Main case: B=2, V=2048 -> Pallas path, grid (2 batches x 2 vertex tiles).
    B, V = 2, 2048
    points = jax.random.normal(k1, (B, V, 3), dtype=jnp.float32)
    ndc = jax.block_until_ready(module(points))

    ref = _reference(points, jnp.broadcast_to(Rz, (B, 3, 3)),
                     jnp.broadcast_to(trans, (B, 3)), module.mat)
    assert ndc.shape == (B, V, 4)
    assert jnp.allclose(ndc, ref, rtol=1e-4, atol=1e-3), \
        float(jnp.max(jnp.abs(ndc - ref)))

    # Ragged small case forced through the Pallas path (exercises lane padding).
    Vs = 300
    pts_small = jax.random.normal(k2, (B, Vs, 3), dtype=jnp.float32)
    module_forced = OpenGLPallas(focal_length=5000.0, principal_point=0.5,
                                 width=16, height=16, rotation=Rz,
                                 translation=trans, min_pallas_verts=0)
    ndc_s = jax.block_until_ready(module_forced(pts_small))
    ref_s = _reference(pts_small, jnp.broadcast_to(Rz, (B, 3, 3)),
                       jnp.broadcast_to(trans, (B, 3)), module.mat)
    assert ndc_s.shape == (B, Vs, 4)
    assert jnp.allclose(ndc_s, ref_s, rtol=1e-4, atol=1e-3), \
        float(jnp.max(jnp.abs(ndc_s - ref_s)))

    print("KERNEL_OK")
</pallas_src>

<mosaic_0001>
module attributes {stable_mosaic.version = 11 : i64} {
  func.func @_opengl_kernel(%arg0: i32, %arg1: i32, %arg2: memref<32xf32, #tpu.memory_space<smem>>, %arg3: memref<1x4x1024xf32, #tpu.memory_space<vmem>>, %arg4: memref<1x4x1024xf32, #tpu.memory_space<vmem>>) attributes {dimension_semantics = [#tpu.dimension_semantics<parallel>, #tpu.dimension_semantics<parallel>], iteration_bounds = array<i64: 2, 2>, scalar_prefetch = 0 : i64, scratch_operands = 0 : i64, tpu.core_type = #tpu.core_type<tc>, window_params = [{transform_indices = @transform_0, window_bounds = array<i64: 32>}, {transform_indices = @transform_1, window_bounds = array<i64: 1, 4, 1024>}, {transform_indices = @transform_2, window_bounds = array<i64: 1, 4, 1024>}]} {
    %c16_i32 = arith.constant 16 : i32
    %0 = arith.muli %arg0, %c16_i32 : i32
    %c0 = arith.constant 0 : index
    %c0_0 = arith.constant 0 : index
    %c0_1 = arith.constant 0 : index
    %1 = vector.load %arg3[%c0, %c0_0, %c0_1] : memref<1x4x1024xf32, #tpu.memory_space<vmem>>, vector<1x4x1024xf32>
    %2 = vector.shape_cast %1 : vector<1x4x1024xf32> to vector<4x1024xf32>
    %3 = vector.extract_strided_slice %2 {offsets = [0, 0], sizes = [1, 1024], strides = [1, 1]} : vector<4x1024xf32> to vector<1x1024xf32>
    %4 = vector.extract_strided_slice %2 {offsets = [1, 0], sizes = [1, 1024], strides = [1, 1]} : vector<4x1024xf32> to vector<1x1024xf32>
    %5 = vector.extract_strided_slice %2 {offsets = [2, 0], sizes = [1, 1024], strides = [1, 1]} : vector<4x1024xf32> to vector<1x1024xf32>
    %6 = vector.extract_strided_slice %2 {offsets = [3, 0], sizes = [1, 1024], strides = [1, 1]} : vector<4x1024xf32> to vector<1x1024xf32>
    %c0_i32 = arith.constant 0 : i32
    %7 = arith.addi %0, %c0_i32 : i32
    %c0_i32_2 = arith.constant 0 : i32
    %8 = arith.addi %7, %c0_i32_2 : i32
    %9 = arith.index_cast %8 : i32 to index
    %10 = memref.load %arg2[%9] : memref<32xf32, #tpu.memory_space<smem>>
    %11 = vector.broadcast %10 : f32 to vector<1x1024xf32>
    %12 = arith.mulf %3, %11 : vector<1x1024xf32>
    %c4_i32 = arith.constant 4 : i32
    %13 = arith.addi %0, %c4_i32 : i32
    %c0_i32_3 = arith.constant 0 : i32
    %14 = arith.addi %13, %c0_i32_3 : i32
    %15 = arith.index_cast %14 : i32 to index
    %16 = memref.load %arg2[%15] : memref<32xf32, #tpu.memory_space<smem>>
    %17 = vector.broadcast %16 : f32 to vector<1x1024xf32>
    %18 = arith.mulf %4, %17 : vector<1x1024xf32>
    %19 = arith.addf %12, %18 : vector<1x1024xf32>
    %c8_i32 = arith.constant 8 : i32
    %20 = arith.addi %0, %c8_i32 : i32
    %c0_i32_4 = arith.constant 0 : i32
    %21 = arith.addi %20, %c0_i32_4 : i32
    %22 = arith.index_cast %21 : i32 to index
    %23 = memref.load %arg2[%22] : memref<32xf32, #tpu.memory_space<smem>>
    %24 = vector.broadcast %23 : f32 to vector<1x1024xf32>
    %25 = arith.mulf %5, %24 : vector<1x1024xf32>
    %26 = arith.addf %19, %25 : vector<1x1024xf32>
    %c12_i32 = arith.constant 12 : i32
    %27 = arith.addi %0, %c12_i32 : i32
    %c0_i32_5 = arith.constant 0 : i32
    %28 = arith.addi %27, %c0_i32_5 : i32
    %29 = arith.index_cast %28 : i32 to index
    %30 = memref.load %arg2[%29] : memref<32xf32, #tpu.memory_space<smem>>
    %31 = vector.broadcast %30 : f32 to vector<1x1024xf32>
    %32 = arith.mulf %6, %31 : vector<1x1024xf32>
    %33 = arith.addf %26, %32 : vector<1x1024xf32>
    %c0_6 = arith.constant 0 : index
    %c0_7 = arith.constant 0 : index
    %c0_8 = arith.constant 0 : index
    %34 = vector.load %arg4[%c0_6, %c0_7, %c0_8] : memref<1x4x1024xf32, #tpu.memory_space<vmem>>, vector<1x1x1024xf32>
    %35 = vector.shape_cast %34 : vector<1x1x1024xf32> to vector<1x1024xf32>
    %36 = vector.shape_cast %33 : vector<1x1024xf32> to vector<1x1x1024xf32>
    tpu.vector_store %arg4[%c0_6, %c0_7, %c0_8], %36 {strides = array<i32>} : memref<1x4x1024xf32, #tpu.memory_space<vmem>>, vector<1x1x1024xf32>,
    %c0_i32_9 = arith.constant 0 : i32
    %37 = arith.addi %0, %c0_i32_9 : i32
    %c1_i32 = arith.constant 1 : i32
    %38 = arith.addi %37, %c1_i32 : i32
    %39 = arith.index_cast %38 : i32 to index
    %40 = memref.load %arg2[%39] : memref<32xf32, #tpu.memory_space<smem>>
    %41 = vector.broadcast %40 : f32 to vector<1x1024xf32>
    %42 = arith.mulf %3, %41 : vector<1x1024xf32>
    %c4_i32_10 = arith.constant 4 : i32
    %43 = arith.addi %0, %c4_i32_10 : i32
    %c1_i32_11 = arith.constant 1 : i32
    %44 = arith.addi %43, %c1_i32_11 : i32
    %45 = arith.index_cast %44 : i32 to index
    %46 = memref.load %arg2[%45] : memref<32xf32, #tpu.memory_space<smem>>
    %47 = vector.broadcast %46 : f32 to vector<1x1024xf32>
    %48 = arith.mulf %4, %47 : vector<1x1024xf32>
    %49 = arith.addf %42, %48 : vector<1x1024xf32>
    %c8_i32_12 = arith.constant 8 : i32
    %50 = arith.addi %0, %c8_i32_12 : i32
    %c1_i32_13 = arith.constant 1 : i32
    %51 = arith.addi %50, %c1_i32_13 : i32
    %52 = arith.index_cast %51 : i32 to index
    %53 = memref.load %arg2[%52] : memref<32xf32, #tpu.memory_space<smem>>
    %54 = vector.broadcast %53 : f32 to vector<1x1024xf32>
    %55 = arith.mulf %5, %54 : vector<1x1024xf32>
    %56 = arith.addf %49, %55 : vector<1x1024xf32>
    %c12_i32_14 = arith.constant 12 : i32
    %57 = arith.addi %0, %c12_i32_14 : i32
    %c1_i32_15 = arith.constant 1 : i32
    %58 = arith.addi %57, %c1_i32_15 : i32
    %59 = arith.index_cast %58 : i32 to index
    %60 = memref.load %arg2[%59] : memref<32xf32, #tpu.memory_space<smem>>
    %61 = vector.broadcast %60 : f32 to vector<1x1024xf32>
    %62 = arith.mulf %6, %61 : vector<1x1024xf32>
    %63 = arith.addf %56, %62 : vector<1x1024xf32>
    %c0_16 = arith.constant 0 : index
    %c1 = arith.constant 1 : index
    %c0_17 = arith.constant 0 : index
    %64 = vector.load %arg4[%c0_16, %c1, %c0_17] : memref<1x4x1024xf32, #tpu.memory_space<vmem>>, vector<1x1x1024xf32>
    %65 = vector.shape_cast %64 : vector<1x1x1024xf32> to vector<1x1024xf32>
    %66 = vector.shape_cast %63 : vector<1x1024xf32> to vector<1x1x1024xf32>
    tpu.vector_store %arg4[%c0_16, %c1, %c0_17], %66 {strides = array<i32>} : memref<1x4x1024xf32, #tpu.memory_space<vmem>>, vector<1x1x1024xf32>,
    %c0_i32_18 = arith.constant 0 : i32
    %67 = arith.addi %0, %c0_i32_18 : i32
    %c2_i32 = arith.constant 2 : i32
    %68 = arith.addi %67, %c2_i32 : i32
    %69 = arith.index_cast %68 : i32 to index
    %70 = memref.load %arg2[%69] : memref<32xf32, #tpu.memory_space<smem>>
    %71 = vector.broadcast %70 : f32 to vector<1x1024xf32>
    %72 = arith.mulf %3, %71 : vector<1x1024xf32>
    %c4_i32_19 = arith.constant 4 : i32
    %73 = arith.addi %0, %c4_i32_19 : i32
    %c2_i32_20 = arith.constant 2 : i32
    %74 = arith.addi %73, %c2_i32_20 : i32
    %75 = arith.index_cast %74 : i32 to index
    %76 = memref.load %arg2[%75] : memref<32xf32, #tpu.memory_space<smem>>
    %77 = vector.broadcast %76 : f32 to vector<1x1024xf32>
    %78 = arith.mulf %4, %77 : vector<1x1024xf32>
    %79 = arith.addf %72, %78 : vector<1x1024xf32>
    %c8_i32_21 = arith.constant 8 : i32
    %80 = arith.addi %0, %c8_i32_21 : i32
    %c2_i32_22 = arith.constant 2 : i32
    %81 = arith.addi %80, %c2_i32_22 : i32
    %82 = arith.index_cast %81 : i32 to index
    %83 = memref.load %arg2[%82] : memref<32xf32, #tpu.memory_space<smem>>
    %84 = vector.broadcast %83 : f32 to vector<1x1024xf32>
    %85 = arith.mulf %5, %84 : vector<1x1024xf32>
    %86 = arith.addf %79, %85 : vector<1x1024xf32>
    %c12_i32_23 = arith.constant 12 : i32
    %87 = arith.addi %0, %c12_i32_23 : i32
    %c2_i32_24 = arith.constant 2 : i32
    %88 = arith.addi %87, %c2_i32_24 : i32
    %89 = arith.index_cast %88 : i32 to index
    %90 = memref.load %arg2[%89] : memref<32xf32, #tpu.memory_space<smem>>
    %91 = vector.broadcast %90 : f32 to vector<1x1024xf32>
    %92 = arith.mulf %6, %91 : vector<1x1024xf32>
    %93 = arith.addf %86, %92 : vector<1x1024xf32>
    %c0_25 = arith.constant 0 : index
    %c2 = arith.constant 2 : index
    %c0_26 = arith.constant 0 : index
    %94 = vector.load %arg4[%c0_25, %c2, %c0_26] : memref<1x4x1024xf32, #tpu.memory_space<vmem>>, vector<1x1x1024xf32>
    %95 = vector.shape_cast %94 : vector<1x1x1024xf32> to vector<1x1024xf32>
    %96 = vector.shape_cast %93 : vector<1x1024xf32> to vector<1x1x1024xf32>
    tpu.vector_store %arg4[%c0_25, %c2, %c0_26], %96 {strides = array<i32>} : memref<1x4x1024xf32, #tpu.memory_space<vmem>>, vector<1x1x1024xf32>,
    %c0_i32_27 = arith.constant 0 : i32
    %97 = arith.addi %0, %c0_i32_27 : i32
    %c3_i32 = arith.constant 3 : i32
    %98 = arith.addi %97, %c3_i32 : i32
    %99 = arith.index_cast %98 : i32 to index
    %100 = memref.load %arg2[%99] : memref<32xf32, #tpu.memory_space<smem>>
    %101 = vector.broadcast %100 : f32 to vector<1x1024xf32>
    %102 = arith.mulf %3, %101 : vector<1x1024xf32>
    %c4_i32_28 = arith.constant 4 : i32
    %103 = arith.addi %0, %c4_i32_28 : i32
    %c3_i32_29 = arith.constant 3 : i32
    %104 = arith.addi %103, %c3_i32_29 : i32
    %105 = arith.index_cast %104 : i32 to index
    %106 = memref.load %arg2[%105] : memref<32xf32, #tpu.memory_space<smem>>
    %107 = vector.broadcast %106 : f32 to vector<1x1024xf32>
    %108 = arith.mulf %4, %107 : vector<1x1024xf32>
    %109 = arith.addf %102, %108 : vector<1x1024xf32>
    %c8_i32_30 = arith.constant 8 : i32
    %110 = arith.addi %0, %c8_i32_30 : i32
    %c3_i32_31 = arith.constant 3 : i32
    %111 = arith.addi %110, %c3_i32_31 : i32
    %112 = arith.index_cast %111 : i32 to index
    %113 = memref.load %arg2[%112] : memref<32xf32, #tpu.memory_space<smem>>
    %114 = vector.broadcast %113 : f32 to vector<1x1024xf32>
    %115 = arith.mulf %5, %114 : vector<1x1024xf32>
    %116 = arith.addf %109, %115 : vector<1x1024xf32>
    %c12_i32_32 = arith.constant 12 : i32
    %117 = arith.addi %0, %c12_i32_32 : i32
    %c3_i32_33 = arith.constant 3 : i32
    %118 = arith.addi %117, %c3_i32_33 : i32
    %119 = arith.index_cast %118 : i32 to index
    %120 = memref.load %arg2[%119] : memref<32xf32, #tpu.memory_space<smem>>
    %121 = vector.broadcast %120 : f32 to vector<1x1024xf32>
    %122 = arith.mulf %6, %121 : vector<1x1024xf32>
    %123 = arith.addf %116, %122 : vector<1x1024xf32>
    %c0_34 = arith.constant 0 : index
    %c3 = arith.constant 3 : index
    %c0_35 = arith.constant 0 : index
    %124 = vector.load %arg4[%c0_34, %c3, %c0_35] : memref<1x4x1024xf32, #tpu.memory_space<vmem>>, vector<1x1x1024xf32>
    %125 = vector.shape_cast %124 : vector<1x1x1024xf32> to vector<1x1024xf32>
    %126 = vector.shape_cast %123 : vector<1x1024xf32> to vector<1x1x1024xf32>
    tpu.vector_store %arg4[%c0_34, %c3, %c0_35], %126 {strides = array<i32>} : memref<1x4x1024xf32, #tpu.memory_space<vmem>>, vector<1x1x1024xf32>,
    return
  }
  func.func @transform_0(%arg0: i32, %arg1: i32) -> i32 {
    %c0_i32 = arith.constant 0 : i32
    %c0_i32_0 = arith.constant 0 : i32
    return %c0_i32 : i32
  }
  func.func @transform_1(%arg0: i32, %arg1: i32) -> (i32, i32, i32) {
    %c0_i32 = arith.constant 0 : i32
    %c0_i32_0 = arith.constant 0 : i32
    return %arg0, %c0_i32, %arg1 : i32, i32, i32
  }
  func.func @transform_2(%arg0: i32, %arg1: i32) -> (i32, i32, i32) {
    %c0_i32 = arith.constant 0 : i32
    %c0_i32_0 = arith.constant 0 : i32
    return %arg0, %c0_i32, %arg1 : i32, i32, i32
  }
}

</mosaic_0001>

<llo_original>
// kernel: tpu_custom_call.1
$region0: #{tpu_custom_call.1}
  #allocation0 [shape = 'u32[]', space=smem, size = 0x4, offset = 0x4, fixed_abs, tag = 'smem constant byte address 0x4 - core index']
  #allocation1 [shape = 'u32[144,128]{1,0:T(1,128)}', space=vmem, size = 0x12000, scoped, tag = 'internal scratch']
  %s0 = inlined_call_operand.hbm [shape: f32[32], index: 0, kind: input, shape index: {}]
  %s1 = inlined_call_operand.hbm [shape: f32[2,4,2048], index: 1, kind: input, shape index: {}]
  %s2 = inlined_call_operand.hbm [shape: f32[2,4,2048], index: 2, kind: output, shape index: {}]
  %s3 = sld [smem:[#allocation0]]
  $region49: #{tpu_custom_call.1} parent=0
    _
  %s5 = ssub.s32 1, %s3
  %s6 = scalar_select 0, %s5, %s3
  $region1: #{tpu_custom_call.1} parent=0
    #allocation2 [shape = 'u8[512]{0}', space=smem, size = 0x200, scoped, tag = 'input window, operand 0, single buffered']
    #allocation3 [shape = 's32[2]{0}', space=sflag, size = 0x8, scoped, tag = 'scoped memory for tpu_custom_call.1']
    #allocation4 [shape = 's32[2]{0}', space=sflag, size = 0x8, scoped, tag = 'scoped memory for tpu_custom_call.1']
    #allocation5 [shape = 's32[2]{0}', space=sflag, size = 0x8, scoped, tag = 'scoped memory for tpu_custom_call.1']
    #allocation6 [shape = 'u8[32768]{0}', space=vmem, size = 0x8000, scoped, tag = 'input window, operand 1']
    #allocation7 [shape = 'u8[32768]{0}', space=vmem, size = 0x8000, scoped, tag = 'output window, operand 0']
    %7 = vsyncpa [#allocation5], 0
    %8 = vsyncpa [#allocation3], 0
    %s9 = scalar_lea.sflag [#allocation3], 1
    %10 = vsyncpa %s9, 0
    %11 = vsyncpa [#allocation4], 0
    %s12 = scalar_lea.sflag [#allocation4], 1
    %13 = vsyncpa %s12, 0
    loop: start=0, step=1, limit=6
    $region2: #{tpu_custom_call.1} parent=1 // loop_pre_header
      _
    $region3: #{tpu_custom_call.1} parent=1 // loop_header
      %s15 = sphi 0, %s19
      %p16 = scmp.ge.s32.totalorder %s15, 6
      %s22 = sphi 0, %s34
      %s23 = sphi 0, %s30
      %s24 = sphi 0, %s22
      %s25 = sphi 0, %s23
      %s26 = sphi 0, %s24
      %s27 = sphi 0, %s25
      %s35 = sphi 0, %s35
      %s37 = sphi 0, %s35
      %s38 = sphi 0, %s37
      %s52 = sphi 0, %s38
      %s60 = sphi 0, %s62
      %s63 = sphi 0, %s60
      %s64 = sphi 0, %s63
      %s80 = sphi 0, %s64
      %s88 = sphi 0, %s90
      %s91 = sphi 0, %s88
      %s92 = sphi 0, %s91
      %s108 = sphi 0, %s92
    $region4: #{tpu_custom_call.1} parent=1 // loop_header_branch
      %18 = sbr.rel (%p16) target = $region8
    $region5: #{tpu_custom_call.1} parent=1 // loop_body
      %s20 = ssub.s32 %s15, 1
      %s21 = ssub.s32 %s15, 2
      %s28 = sadd.s32 1, %s23
      %p29 = scmp.ge.s32.totalorder %s28, 2
      %s30 = scalar_select %p29, 0, %s28
      %s31 = sadd.s32 1, %s22
      %s32 = scalar_select %p29, %s31, %s22
      %p33 = scmp.ge.s32.totalorder %s32, 2
      %s34 = scalar_select %p33, 0, %s32
      %s36 = sadd.s32 %s35, 1
      %p39 = scmp.eq.s32.totalorder %s15, 3
      %p40 = scmp.ne.s32.totalorder %s35, %s37
      %p41 = scmp.eq.s32.totalorder %s15, 0
      %p42 = por %p40, %p41
      %p43 = scmp.ne.s32.totalorder %s35, %s37
      %p44 = scmp.eq.s32.totalorder %s20, 3
      %p45 = por %p43, %p44
      %p46 = scmp.ne.s32.totalorder %s37, %s38
      %p47 = scmp.eq.s32.totalorder %s20, 0
      %p48 = por %p46, %p47
      %p49 = scmp.ne.s32.totalorder %s37, %s38
      %p50 = scmp.eq.s32.totalorder %s21, 3
      %p51 = por %p49, %p50
      %p53 = scmp.ne.s32.totalorder %s38, %s52
      %p54 = scmp.eq.s32.totalorder %s21, 0
      %p55 = por %p53, %p54
      %s56 = ssub.s32 %s22, %s34
      %s57 = ssub.s32 %s23, %s30
      %s58 = sor.u32 %s56, %s57
      %p59 = scmp.eq.s32.totalorder %s58, 0
      %s61 = sadd.s32 %s60, 1
      %s62 = scalar_select %p59, %s60, %s61
      %p65 = pneg %p59
      %p66 = scmp.eq.s32.totalorder %s15, 3
      %p67 = por %p65, %p66
      %p68 = scmp.ne.s32.totalorder %s60, %s63
      %p69 = scmp.eq.s32.totalorder %s15, 0
      %p70 = por %p68, %p69
      %p71 = scmp.ne.s32.totalorder %s60, %s63
      %p72 = scmp.eq.s32.totalorder %s20, 3
      %p73 = por %p71, %p72
      %p74 = scmp.ne.s32.totalorder %s63, %s64
      %p75 = scmp.eq.s32.totalorder %s20, 0
      %p76 = por %p74, %p75
      %p77 = scmp.ne.s32.totalorder %s63, %s64
      %p78 = scmp.eq.s32.totalorder %s21, 3
      %p79 = por %p77, %p78
      %p81 = scmp.ne.s32.totalorder %s64, %s80
      %p82 = scmp.eq.s32.totalorder %s21, 0
      %p83 = por %p81, %p82
      %s84 = ssub.s32 %s22, %s34
      %s85 = ssub.s32 %s23, %s30
      %s86 = sor.u32 %s84, %s85
      %p87 = scmp.eq.s32.totalorder %s86, 0
      %s89 = sadd.s32 %s88, 1
      %s90 = scalar_select %p87, %s88, %s89
      %p93 = pneg %p87
      %p94 = scmp.eq.s32.totalorder %s15, 3
      %p95 = por %p93, %p94
      %p96 = scmp.ne.s32.totalorder %s88, %s91
      %p97 = scmp.eq.s32.totalorder %s15, 0
      %p98 = por %p96, %p97
      %p99 = scmp.ne.s32.totalorder %s88, %s91
      %p100 = scmp.eq.s32.totalorder %s20, 3
      %p101 = por %p99, %p100
      %p102 = scmp.ne.s32.totalorder %s91, %s92
      %p103 = scmp.eq.s32.totalorder %s20, 0
      %p104 = por %p102, %p103
      %p105 = scmp.ne.s32.totalorder %s91, %s92
      %p106 = scmp.eq.s32.totalorder %s21, 3
      %p107 = por %p105, %p106
      %p109 = scmp.ne.s32.totalorder %s92, %s108
      %p110 = scmp.eq.s32.totalorder %s21, 0
      %p111 = por %p109, %p110
      %p112 = scmp.le.s32.totalorder 1, %s15
      %p113 = scmp.lt.s32.totalorder %s15, 5
      %p114 = pnand %p112, %p113
      %p115 = pneg %p114
      // Predicated region
      $region9: #{tpu_custom_call.1} parent=5 // pred_check
        _
      $region10: #{tpu_custom_call.1} parent=5 // pred_check_branch
        %117 = sbr.rel (%p114) target = $region12
      $region11: #{tpu_custom_call.1} parent=5 // pred_region
        %s118 = ssub.s32 %s15, 1
        // Predicated region
        $region13: #{tpu_custom_call.1} parent=11 // pred_check
          %p119 = pneg %p48
        $region14: #{tpu_custom_call.1} parent=11 // pred_check_branch
          %121 = sbr.rel (%p119) target = $region16
        $region15: #{tpu_custom_call.1} parent=11 // pred_region
          %s123 = ssub.s32 16, 16
          %124 = vsyncadd [#allocation5], %s123
          %127 = dma.hbm_to_smem %s0, 16, [#allocation2], [#allocation5]
        $region16: #{tpu_custom_call.1} parent=11 // pred_fallthru
          _
      $region12: #{tpu_custom_call.1} parent=5 // pred_fallthru
        _
      %p128 = scmp.lt.s32.totalorder %s15, 4
      // Predicated region
      $region17: #{tpu_custom_call.1} parent=5 // pred_check
        %p129 = pneg %p128
      $region18: #{tpu_custom_call.1} parent=5 // pred_check_branch
        %131 = sbr.rel (%p129) target = $region20
      $region19: #{tpu_custom_call.1} parent=5 // pred_region
        // Predicated region
        $region21: #{tpu_custom_call.1} parent=19 // pred_check
          %p132 = pneg %p70
        $region22: #{tpu_custom_call.1} parent=19 // pred_check_branch
          %134 = sbr.rel (%p132) target = $region24
        $region23: #{tpu_custom_call.1} parent=19 // pred_region
          %s135 = sand.u32 %s60, 1
          %s136 = scalar_lea.sflag [#allocation3], %s135
          %s137 = sand.u32 %s60, 1
          %s138 = smul.addr %s137, 32
          %s139 = scalar_lea.vmem [#allocation6], %s138
          %s140 = smul.u32 8, %s23
          %s142 = ssub.s32 512, 512
          %143 = vsyncadd %s136, %s142
          %s144 = smul.addr %s22, 16
          %s145 = sadd.s32 %s140, %s144
          %s146 = smul.addr %s145, 64
          %s147 = scalar_lea.hbm %s1, %s146
          %s149 = sshll.u32 %s139, 4
          %s150 = int_to_ptr.vmem [resolvable:$true] %s149
          %152 = dma.hbm_to_vmem [thread:$0]  %s147, 512, %s150, %s136
        $region24: #{tpu_custom_call.1} parent=19 // pred_fallthru
          _
      $region20: #{tpu_custom_call.1} parent=5 // pred_fallthru
        _
      %p153 = scmp.le.s32.totalorder 1, %s15
      %p154 = scmp.lt.s32.totalorder %s15, 5
      %p155 = pnand %p153, %p154
      %p156 = pneg %p155
      // Predicated region
      $region25: #{tpu_custom_call.1} parent=5 // pred_check
        _
      $region26: #{tpu_custom_call.1} parent=5 // pred_check_branch
        %158 = sbr.rel (%p155) target = $region28
      $region27: #{tpu_custom_call.1} parent=5 // pred_region
        %s159 = ssub.s32 %s15, 1
        // Predicated region
        $region29: #{tpu_custom_call.1} parent=27 // pred_check
          %p160 = pneg %p48
        $region30: #{tpu_custom_call.1} parent=27 // pred_check_branch
          %162 = sbr.rel (%p160) target = $region32
        $region31: #{tpu_custom_call.1} parent=27 // pred_region
          %163 = dma.done [#allocation5], 16
        $region32: #{tpu_custom_call.1} parent=27 // pred_fallthru
          _
        %s164 = sand.u32 %s63, 1
        %s165 = scalar_lea.sflag [#allocation3], %s164
        %s166 = sand.u32 %s63, 1
        %s167 = smul.addr %s166, 32
        %s168 = scalar_lea.vmem [#allocation6], %s167
        // Predicated region
        $region33: #{tpu_custom_call.1} parent=27 // pred_check
          %p169 = pneg %p76
        $region34: #{tpu_custom_call.1} parent=27 // pred_check_branch
          %171 = sbr.rel (%p169) target = $region36
        $region35: #{tpu_custom_call.1} parent=27 // pred_region
          %172 = dma.done %s165, 512
        $region36: #{tpu_custom_call.1} parent=27 // pred_fallthru
          _
        %173 = sfence
        %p174 = pneg %p48
        %p175 = pneg %p45
        %s176 = sand.u32 %s63, 1
        %s177 = scalar_lea.sflag [#allocation3], %s176
        %s178 = sand.u32 %s63, 1
        %s179 = smul.addr %s178, 32
        %s180 = scalar_lea.vmem [#allocation6], %s179
        %p181 = pneg %p76
        %p182 = pneg %p73
        %p183 = pneg %p104
        %p184 = pneg %p101
        %s185 = sand.u32 %s91, 1
        %s186 = scalar_lea.sflag [#allocation4], %s185
        %s187 = sand.u32 %s91, 1
        %s188 = smul.addr %s187, 32
        %s189 = scalar_lea.vmem [#allocation7], %s188
        %s190 = smul.u32 8, %s25
        %s191 = smul.u32 8, %s25
        %s192 = smul.u32 %s24, 16
        %v193 = vld [vmem:[%s168] sm:$0xff]
        %v194 = vld [vmem:[%s168 + $0x8] sm:$0xff]
        %v195 = vld [vmem:[%s168 + $0x10] sm:$0xff]
        %v196 = vld [vmem:[%s168 + $0x18] sm:$0xff]
        %s197 = sld [smem:[#allocation2 + %s192]]
        %v198 = vstv %s197
        %v199 = vmul.f32 %v193, %v198
        %v200 = vmul.f32 %v194, %v198
        %v201 = vmul.f32 %v195, %v198
        %v202 = vmul.f32 %v196, %v198
        %s203 = sadd.s32 %s192, 4
        %s204 = sld [smem:[#allocation2 + %s203]]
        %v205 = vstv %s204
        %v206 = vmul.f32 %v193, %v205
        %v207 = vmul.f32 %v194, %v205
        %v208 = vmul.f32 %v195, %v205
        %v209 = vmul.f32 %v196, %v205
        %v214 = vrot.slane %v206, 5
        %v215 = vrot.slane %v214, 4
        %v216 = vrot.slane %v207, 5
        %v217 = vrot.slane %v216, 4
        %v218 = vrot.slane %v208, 5
        %v219 = vrot.slane %v218, 4
        %v220 = vrot.slane %v209, 5
        %v221 = vrot.slane %v220, 4
        %v226 = vadd.f32 %v199, %v215
        %v227 = vadd.f32 %v200, %v217
        %v228 = vadd.f32 %v201, %v219
        %v229 = vadd.f32 %v202, %v221
        %s230 = sadd.s32 %s192, 8
        %s231 = sld [smem:[#allocation2 + %s230]]
        %v232 = vstv %s231
        %v233 = vmul.f32 %v193, %v232
        %v234 = vmul.f32 %v194, %v232
        %v235 = vmul.f32 %v195, %v232
        %v236 = vmul.f32 %v196, %v232
        %v241 = vrot.slane %v233, 6
        %v242 = vrot.slane %v241, 4
        %v243 = vrot.slane %v234, 6
        %v244 = vrot.slane %v243, 4
        %v245 = vrot.slane %v235, 6
        %v246 = vrot.slane %v245, 4
        %v247 = vrot.slane %v236, 6
        %v248 = vrot.slane %v247, 4
        %v253 = vadd.f32 %v226, %v242
        %v254 = vadd.f32 %v227, %v244
        %v255 = vadd.f32 %v228, %v246
        %v256 = vadd.f32 %v229, %v248
        %s257 = sadd.s32 %s192, 12
        %s258 = sld [smem:[#allocation2 + %s257]]
        %v259 = vstv %s258
        %v260 = vmul.f32 %v193, %v259
        %v261 = vmul.f32 %v194, %v259
        %v262 = vmul.f32 %v195, %v259
        %v263 = vmul.f32 %v196, %v259
        %v268 = vrot.slane %v260, 7
        %v269 = vrot.slane %v268, 4
        %v270 = vrot.slane %v261, 7
        %v271 = vrot.slane %v270, 4
        %v272 = vrot.slane %v262, 7
        %v273 = vrot.slane %v272, 4
        %v274 = vrot.slane %v263, 7
        %v275 = vrot.slane %v274, 4
        %v280 = vadd.f32 %v253, %v269
        %v281 = vadd.f32 %v254, %v271
        %v282 = vadd.f32 %v255, %v273
        %v283 = vadd.f32 %v256, %v275
        %v289 = vunpack.c.l.s4 1966171168
        %v290 = vunpack.c.0.s8 %v289
        %v291 = vlaneseq
        %v292 = vshrl.u32 %v291, 7
        %v293 = vsub.s32 %v290, %v292
        %v294 = vrot.slane %v280, %v293
        %v296 = vunpack.c.l.s4 1966171168
        %v297 = vunpack.c.0.s8 %v296
        %v298 = vlaneseq
        %v299 = vshrl.u32 %v298, 7
        %v300 = vsub.s32 %v297, %v299
        %v301 = vrot.slane %v281, %v300
        %v303 = vunpack.c.l.s4 1966171168
        %v304 = vunpack.c.0.s8 %v303
        %v305 = vlaneseq
        %v306 = vshrl.u32 %v305, 7
        %v307 = vsub.s32 %v304, %v306
        %v308 = vrot.slane %v282, %v307
        %v310 = vunpack.c.l.s4 1966171168
        %v311 = vunpack.c.0.s8 %v310
        %v312 = vlaneseq
        %v313 = vshrl.u32 %v312, 7
        %v314 = vsub.s32 %v311, %v313
        %v315 = vrot.slane %v283, %v314
        %v316 = vcombine.low %v294, %v301
        %v317 = vcombine.low %v308, %v315
        %v319 = vunpack.c.l.s4 1966171168
        %v320 = vunpack.c.0.s8 %v319
        %v321 = vlaneseq
        %v322 = vshrl.u32 %v321, 7
        %v323 = vsub.s32 %v320, %v322
        %v324 = vrot.slane %v316, %v323
        %v326 = vunpack.c.l.s4 1966171168
        %v327 = vunpack.c.0.s8 %v326
        %v328 = vlaneseq
        %v329 = vshrl.u32 %v328, 7
        %v330 = vsub.s32 %v327, %v329
        %v331 = vrot.slane %v317, %v330
        %v332 = vcombine.low %v324, %v331
        %334 = vst [vmem:[%s189] ss:$4 sm:$0xff] %v332
        %s335 = sadd.s32 %s192, 1
        %s336 = sld [smem:[#allocation2 + %s335]]
        %v337 = vstv %s336
        %v338 = vmul.f32 %v193, %v337
        %v339 = vmul.f32 %v194, %v337
        %v340 = vmul.f32 %v195, %v337
        %v341 = vmul.f32 %v196, %v337
        %s342 = sadd.s32 %s192, 5
        %s343 = sld [smem:[#allocation2 + %s342]]
        %v344 = vstv %s343
        %v345 = vmul.f32 %v193, %v344
        %v346 = vmul.f32 %v194, %v344
        %v347 = vmul.f32 %v195, %v344
        %v348 = vmul.f32 %v196, %v344
        %v353 = vrot.slane %v345, 5
        %v354 = vrot.slane %v353, 4
        %v355 = vrot.slane %v346, 5
        %v356 = vrot.slane %v355, 4
        %v357 = vrot.slane %v347, 5
        %v358 = vrot.slane %v357, 4
        %v359 = vrot.slane %v348, 5
        %v360 = vrot.slane %v359, 4
        %v365 = vadd.f32 %v338, %v354
        %v366 = vadd.f32 %v339, %v356
        %v367 = vadd.f32 %v340, %v358
        %v368 = vadd.f32 %v341, %v360
        %s369 = sadd.s32 %s192, 9
        %s370 = sld [smem:[#allocation2 + %s369]]
        %v371 = vstv %s370
        %v372 = vmul.f32 %v193, %v371
        %v373 = vmul.f32 %v194, %v371
        %v374 = vmul.f32 %v195, %v371
        %v375 = vmul.f32 %v196, %v371
        %v380 = vrot.slane %v372, 6
        %v381 = vrot.slane %v380, 4
        %v382 = vrot.slane %v373, 6
        %v383 = vrot.slane %v382, 4
        %v384 = vrot.slane %v374, 6
        %v385 = vrot.slane %v384, 4
        %v386 = vrot.slane %v375, 6
        %v387 = vrot.slane %v386, 4
        %v392 = vadd.f32 %v365, %v381
        %v393 = vadd.f32 %v366, %v383
        %v394 = vadd.f32 %v367, %v385
        %v395 = vadd.f32 %v368, %v387
        %s396 = sadd.s32 %s192, 13
        %s397 = sld [smem:[#allocation2 + %s396]]
        %v398 = vstv %s397
        %v399 = vmul.f32 %v193, %v398
        %v400 = vmul.f32 %v194, %v398
        %v401 = vmul.f32 %v195, %v398
        %v402 = vmul.f32 %v196, %v398
        %v407 = vrot.slane %v399, 7
        %v408 = vrot.slane %v407, 4
        %v409 = vrot.slane %v400, 7
        %v410 = vrot.slane %v409, 4
        %v411 = vrot.slane %v401, 7
        %v412 = vrot.slane %v411, 4
        %v413 = vrot.slane %v402, 7
        %v414 = vrot.slane %v413, 4
        %v419 = vadd.f32 %v392, %v408
        %v420 = vadd.f32 %v393, %v410
        %v421 = vadd.f32 %v394, %v412
        %v422 = vadd.f32 %v395, %v414
        %v428 = vunpack.c.l.s4 1966171168
        %v429 = vunpack.c.0.s8 %v428
        %v430 = vlaneseq
        %v431 = vshrl.u32 %v430, 7
        %v432 = vsub.s32 %v429, %v431
        %v433 = vrot.slane %v419, %v432
        %v435 = vunpack.c.l.s4 1966171168
        %v436 = vunpack.c.0.s8 %v435
        %v437 = vlaneseq
        %v438 = vshrl.u32 %v437, 7
        %v439 = vsub.s32 %v436, %v438
        %v440 = vrot.slane %v420, %v439
        %v442 = vunpack.c.l.s4 1966171168
        %v443 = vunpack.c.0.s8 %v442
        %v444 = vlaneseq
        %v445 = vshrl.u32 %v444, 7
        %v446 = vsub.s32 %v443, %v445
        %v447 = vrot.slane %v421, %v446
        %v449 = vunpack.c.l.s4 1966171168
        %v450 = vunpack.c.0.s8 %v449
        %v451 = vlaneseq
        %v452 = vshrl.u32 %v451, 7
        %v453 = vsub.s32 %v450, %v452
        %v454 = vrot.slane %v422, %v453
        %v455 = vcombine.low %v433, %v440
        %v456 = vcombine.low %v447, %v454
        %v458 = vunpack.c.l.s4 1966171168
        %v459 = vunpack.c.0.s8 %v458
        %v460 = vlaneseq
        %v461 = vshrl.u32 %v460, 7
        %v462 = vsub.s32 %v459, %v461
        %v463 = vrot.slane %v455, %v462
        %v465 = vunpack.c.l.s4 1966171168
        %v466 = vunpack.c.0.s8 %v465
        %v467 = vlaneseq
        %v468 = vshrl.u32 %v467, 7
        %v469 = vsub.s32 %v466, %v468
        %v470 = vrot.slane %v456, %v469
        %v471 = vcombine.low %v463, %v470
        %s473 = scalar_lea.vmem %s189, 1 [#allocation7]
        %474 = vst [vmem:[%s473] ss:$4 sm:$0xff] %v471
        %s475 = sadd.s32 %s192, 2
        %s476 = sld [smem:[#allocation2 + %s475]]
        %v477 = vstv %s476
        %v478 = vmul.f32 %v193, %v477
        %v479 = vmul.f32 %v194, %v477
        %v480 = vmul.f32 %v195, %v477
        %v481 = vmul.f32 %v196, %v477
        %s482 = sadd.s32 %s192, 6
        %s483 = sld [smem:[#allocation2 + %s482]]
        %v484 = vstv %s483
        %v485 = vmul.f32 %v193, %v484
        %v486 = vmul.f32 %v194, %v484
        %v487 = vmul.f32 %v195, %v484
        %v488 = vmul.f32 %v196, %v484
        %v493 = vrot.slane %v485, 5
        %v494 = vrot.slane %v493, 4
        %v495 = vrot.slane %v486, 5
        %v496 = vrot.slane %v495, 4
        %v497 = vrot.slane %v487, 5
        %v498 = vrot.slane %v497, 4
        %v499 = vrot.slane %v488, 5
        %v500 = vrot.slane %v499, 4
        %v505 = vadd.f32 %v478, %v494
        %v506 = vadd.f32 %v479, %v496
        %v507 = vadd.f32 %v480, %v498
        %v508 = vadd.f32 %v481, %v500
        %s509 = sadd.s32 %s192, 10
        %s510 = sld [smem:[#allocation2 + %s509]]
        %v511 = vstv %s510
        %v512 = vmul.f32 %v193, %v511
        %v513 = vmul.f32 %v194, %v511
        %v514 = vmul.f32 %v195, %v511
        %v515 = vmul.f32 %v196, %v511
        %v520 = vrot.slane %v512, 6
        %v521 = vrot.slane %v520, 4
        %v522 = vrot.slane %v513, 6
        %v523 = vrot.slane %v522, 4
        %v524 = vrot.slane %v514, 6
        %v525 = vrot.slane %v524, 4
        %v526 = vrot.slane %v515, 6
        %v527 = vrot.slane %v526, 4
        %v532 = vadd.f32 %v505, %v521
        %v533 = vadd.f32 %v506, %v523
        %v534 = vadd.f32 %v507, %v525
        %v535 = vadd.f32 %v508, %v527
        %s536 = sadd.s32 %s192, 14
        %s537 = sld [smem:[#allocation2 + %s536]]
        %v538 = vstv %s537
        %v539 = vmul.f32 %v193, %v538
        %v540 = vmul.f32 %v194, %v538
        %v541 = vmul.f32 %v195, %v538
        %v542 = vmul.f32 %v196, %v538
        %v547 = vrot.slane %v539, 7
        %v548 = vrot.slane %v547, 4
        %v549 = vrot.slane %v540, 7
        %v550 = vrot.slane %v549, 4
        %v551 = vrot.slane %v541, 7
        %v552 = vrot.slane %v551, 4
        %v553 = vrot.slane %v542, 7
        %v554 = vrot.slane %v553, 4
        %v559 = vadd.f32 %v532, %v548
        %v560 = vadd.f32 %v533, %v550
        %v561 = vadd.f32 %v534, %v552
        %v562 = vadd.f32 %v535, %v554
        %v568 = vunpack.c.l.s4 1966171168
        %v569 = vunpack.c.0.s8 %v568
        %v570 = vlaneseq
        %v571 = vshrl.u32 %v570, 7
        %v572 = vsub.s32 %v569, %v571
        %v573 = vrot.slane %v559, %v572
        %v575 = vunpack.c.l.s4 1966171168
        %v576 = vunpack.c.0.s8 %v575
        %v577 = vlaneseq
        %v578 = vshrl.u32 %v577, 7
        %v579 = vsub.s32 %v576, %v578
        %v580 = vrot.slane %v560, %v579
        %v582 = vunpack.c.l.s4 1966171168
        %v583 = vunpack.c.0.s8 %v582
        %v584 = vlaneseq
        %v585 = vshrl.u32 %v584, 7
        %v586 = vsub.s32 %v583, %v585
        %v587 = vrot.slane %v561, %v586
        %v589 = vunpack.c.l.s4 1966171168
        %v590 = vunpack.c.0.s8 %v589
        %v591 = vlaneseq
        %v592 = vshrl.u32 %v591, 7
        %v593 = vsub.s32 %v590, %v592
        %v594 = vrot.slane %v562, %v593
        %v595 = vcombine.low %v573, %v580
        %v596 = vcombine.low %v587, %v594
        %v598 = vunpack.c.l.s4 1966171168
        %v599 = vunpack.c.0.s8 %v598
        %v600 = vlaneseq
        %v601 = vshrl.u32 %v600, 7
        %v602 = vsub.s32 %v599, %v601
        %v603 = vrot.slane %v595, %v602
        %v605 = vunpack.c.l.s4 1966171168
        %v606 = vunpack.c.0.s8 %v605
        %v607 = vlaneseq
        %v608 = vshrl.u32 %v607, 7
        %v609 = vsub.s32 %v606, %v608
        %v610 = vrot.slane %v596, %v609
        %v611 = vcombine.low %v603, %v610
        %s613 = scalar_lea.vmem %s189, 2 [#allocation7]
        %614 = vst [vmem:[%s613] ss:$4 sm:$0xff] %v611
        %s615 = sadd.s32 %s192, 3
        %s616 = sld [smem:[#allocation2 + %s615]]
        %v617 = vstv %s616
        %v618 = vmul.f32 %v193, %v617
        %v619 = vmul.f32 %v194, %v617
        %v620 = vmul.f32 %v195, %v617
        %v621 = vmul.f32 %v196, %v617
        %s622 = sadd.s32 %s192, 7
        %s623 = sld [smem:[#allocation2 + %s622]]
        %v624 = vstv %s623
        %v625 = vmul.f32 %v193, %v624
        %v626 = vmul.f32 %v194, %v624
        %v627 = vmul.f32 %v195, %v624
        %v628 = vmul.f32 %v196, %v624
        %v633 = vrot.slane %v625, 5
        %v634 = vrot.slane %v633, 4
        %v635 = vrot.slane %v626, 5
        %v636 = vrot.slane %v635, 4
        %v637 = vrot.slane %v627, 5
        %v638 = vrot.slane %v637, 4
        %v639 = vrot.slane %v628, 5
        %v640 = vrot.slane %v639, 4
        %v645 = vadd.f32 %v618, %v634
        %v646 = vadd.f32 %v619, %v636
        %v647 = vadd.f32 %v620, %v638
        %v648 = vadd.f32 %v621, %v640
        %s649 = sadd.s32 %s192, 11
        %s650 = sld [smem:[#allocation2 + %s649]]
        %v651 = vstv %s650
        %v652 = vmul.f32 %v193, %v651
        %v653 = vmul.f32 %v194, %v651
        %v654 = vmul.f32 %v195, %v651
        %v655 = vmul.f32 %v196, %v651
        %v660 = vrot.slane %v652, 6
        %v661 = vrot.slane %v660, 4
        %v662 = vrot.slane %v653, 6
        %v663 = vrot.slane %v662, 4
        %v664 = vrot.slane %v654, 6
        %v665 = vrot.slane %v664, 4
        %v666 = vrot.slane %v655, 6
        %v667 = vrot.slane %v666, 4
        %v672 = vadd.f32 %v645, %v661
        %v673 = vadd.f32 %v646, %v663
        %v674 = vadd.f32 %v647, %v665
        %v675 = vadd.f32 %v648, %v667
        %s676 = sadd.s32 %s192, 15
        %s677 = sld [smem:[#allocation2 + %s676]]
        %v678 = vstv %s677
        %v679 = vmul.f32 %v193, %v678
        %v680 = vmul.f32 %v194, %v678
        %v681 = vmul.f32 %v195, %v678
        %v682 = vmul.f32 %v196, %v678
        %v687 = vrot.slane %v679, 7
        %v688 = vrot.slane %v687, 4
        %v689 = vrot.slane %v680, 7
        %v690 = vrot.slane %v689, 4
        %v691 = vrot.slane %v681, 7
        %v692 = vrot.slane %v691, 4
        %v693 = vrot.slane %v682, 7
        %v694 = vrot.slane %v693, 4
        %v699 = vadd.f32 %v672, %v688
        %v700 = vadd.f32 %v673, %v690
        %v701 = vadd.f32 %v674, %v692
        %v702 = vadd.f32 %v675, %v694
        %v708 = vunpack.c.l.s4 1966171168
        %v709 = vunpack.c.0.s8 %v708
        %v710 = vlaneseq
        %v711 = vshrl.u32 %v710, 7
        %v712 = vsub.s32 %v709, %v711
        %v713 = vrot.slane %v699, %v712
        %v715 = vunpack.c.l.s4 1966171168
        %v716 = vunpack.c.0.s8 %v715
        %v717 = vlaneseq
        %v718 = vshrl.u32 %v717, 7
        %v719 = vsub.s32 %v716, %v718
        %v720 = vrot.slane %v700, %v719
        %v722 = vunpack.c.l.s4 1966171168
        %v723 = vunpack.c.0.s8 %v722
        %v724 = vlaneseq
        %v725 = vshrl.u32 %v724, 7
        %v726 = vsub.s32 %v723, %v725
        %v727 = vrot.slane %v701, %v726
        %v729 = vunpack.c.l.s4 1966171168
        %v730 = vunpack.c.0.s8 %v729
        %v731 = vlaneseq
        %v732 = vshrl.u32 %v731, 7
        %v733 = vsub.s32 %v730, %v732
        %v734 = vrot.slane %v702, %v733
        %v735 = vcombine.low %v713, %v720
        %v736 = vcombine.low %v727, %v734
        %v738 = vunpack.c.l.s4 1966171168
        %v739 = vunpack.c.0.s8 %v738
        %v740 = vlaneseq
        %v741 = vshrl.u32 %v740, 7
        %v742 = vsub.s32 %v739, %v741
        %v743 = vrot.slane %v735, %v742
        %v745 = vunpack.c.l.s4 1966171168
        %v746 = vunpack.c.0.s8 %v745
        %v747 = vlaneseq
        %v748 = vshrl.u32 %v747, 7
        %v749 = vsub.s32 %v746, %v748
        %v750 = vrot.slane %v736, %v749
        %v751 = vcombine.low %v743, %v750
        %s753 = scalar_lea.vmem %s189, 3 [#allocation7]
        %754 = vst [vmem:[%s753] ss:$4 sm:$0xff] %v751
        %s755 = sand.u32 %s91, 1
        %s756 = scalar_lea.sflag [#allocation4], %s755
        %s757 = sand.u32 %s91, 1
        %s758 = smul.addr %s757, 32
        %s759 = scalar_lea.vmem [#allocation7], %s758
        // Predicated region
        $region37: #{tpu_custom_call.1} parent=27 // pred_check
          %p760 = pneg %p101
        $region38: #{tpu_custom_call.1} parent=27 // pred_check_branch
          %762 = sbr.rel (%p760) target = $region40
        $region39: #{tpu_custom_call.1} parent=27 // pred_region
          %s763 = smul.u32 8, %s25
          %s765 = ssub.s32 512, 512
          %766 = vsyncadd %s756, %s765
          %s767 = smul.addr %s24, 16
          %s768 = sadd.s32 %s763, %s767
          %s769 = smul.addr %s768, 64
          %s770 = scalar_lea.hbm %s2, %s769
          %s772 = sshll.u32 %s759, 4
          %s773 = int_to_ptr.vmem [resolvable:$true] %s772
          %775 = dma.vmem_to_hbm [thread:$0]  %s773, 512, %s770, %s756
        $region40: #{tpu_custom_call.1} parent=27 // pred_fallthru
          _
      $region28: #{tpu_custom_call.1} parent=5 // pred_fallthru
        _
      %p776 = scmp.le.s32.totalorder 2, %s15
      // Predicated region
      $region41: #{tpu_custom_call.1} parent=5 // pred_check
        %p777 = pneg %p776
      $region42: #{tpu_custom_call.1} parent=5 // pred_check_branch
        %779 = sbr.rel (%p777) target = $region44
      $region43: #{tpu_custom_call.1} parent=5 // pred_region
        %s780 = ssub.s32 %s15, 2
        // Predicated region
        $region45: #{tpu_custom_call.1} parent=43 // pred_check
          %p781 = pneg %p107
        $region46: #{tpu_custom_call.1} parent=43 // pred_check_branch
          %783 = sbr.rel (%p781) target = $region48
        $region47: #{tpu_custom_call.1} parent=43 // pred_region
          %s784 = sand.u32 %s92, 1
          %s785 = scalar_lea.sflag [#allocation4], %s784
          %s786 = sand.u32 %s92, 1
          %s787 = smul.addr %s786, 32
          %s788 = scalar_lea.vmem [#allocation7], %s787
          %789 = dma.done %s785, 512
        $region48: #{tpu_custom_call.1} parent=43 // pred_fallthru
          _
      $region44: #{tpu_custom_call.1} parent=5 // pred_fallthru
        _
    $region6: #{tpu_custom_call.1} parent=1 // loop_footer
      %s19 = sadd.s32 1, %s15
    $region7: #{tpu_custom_call.1} parent=1 // loop_footer_branch
      %14 = sbr.rel target = $region3
    $region8: #{tpu_custom_call.1} parent=1 // loop_exit
      _
    %790 = vsyncpa [#allocation3], 1
    %s791 = scalar_lea.sflag [#allocation3], 1
    %792 = vsyncpa %s791, 1
    %793 = vsyncpa [#allocation4], 1
    %s794 = scalar_lea.sflag [#allocation4], 1
    %795 = vsyncpa %s794, 1
    %796 = vsyncpa [#allocation5], 1
    %s797 = scalar_lea.sflag [#allocation5], 1
    %798 = vsyncpa %s797, 1

</llo_original>
